<compile_context>
chip_gen: v7x
topology: tpu7x:2x2x1
jax: 0.10.0
libtpu: 0.0.40
codegen_flags: <defaults>
</compile_context>

<pallas_src>
import functools

import jax
import jax.numpy as jnp
from jax.experimental import pallas as pl
from jax.experimental.pallas import tpu as pltpu


DROPOUT_P = 0.3
# Keep an element iff its uint32 random bits >= this threshold  (P(keep)=0.7).
_KEEP_THRESHOLD = int(round(DROPOUT_P * (2 ** 32)))      # 1288490189
_KEEP_SCALE = 1.0 / (1.0 - DROPOUT_P)

# Lanes of the N axis processed per grid step.  A (3, 32768) f32 tile pads to
# (8, 32768) = 1 MiB in VMEM; with double buffering (+ optional dropout bits
# + output) total VMEM stays far under v7x's 32 MiB scoped default.
_BLOCK_N = 32768


def _round_up(x, m):
    return ((x + m - 1) // m) * m


def _mynet_kernel(wb_ref, *refs, training: bool):
    """wb_ref: SMEM (4,) f32 = [w0, w1, w2, b].
    x_ref: (3, bn) native dtype; bits_ref (training only): (3, bn) uint32;
    o_ref: (1, bn) f32 (lane-dense)."""
    if training:
        x_ref, bits_ref, o_ref = refs
    else:
        x_ref, o_ref = refs

    x = x_ref[...].astype(jnp.float32)                    # (3, bn)

    if training:
        # Inverted dropout: direct uint32 threshold compare on raw bits.
        keep = bits_ref[...] >= jnp.uint32(_KEEP_THRESHOLD)
        x = jnp.where(keep, x * jnp.float32(_KEEP_SCALE), 0.0)

    w0 = wb_ref[0]
    w1 = wb_ref[1]
    w2 = wb_ref[2]
    b = wb_ref[3]

    # Linear(3, 1) as pure VPU FMAs -> (1, bn) lane-dense store (no MXU).
    o_ref[...] = x[0:1, :] * w0 + x[1:2, :] * w1 + x[2:3, :] * w2 + b


def mynet_forward(inputs, weight, bias, *, key=None, training=False,
                  block_n=_BLOCK_N):
    """inputs: (..., 3) float array (any float dtype).  weight: 3-element
    array (nn.Linear weight, (1,3) or (3,1)).  bias: (1,).
    Returns f32 logits of shape inputs.shape[:-1] + (1,)."""
    assert inputs.shape[-1] == 3, "MYNET.score expects 3 input features"
    lead = inputs.shape[:-1]
    n = 1
    for d in lead:
        n *= d

    # Feature-major, lane-dense layout (3, N).  Native dtype; cast in-kernel.
    # (For tiny N a fused XLA mul-add beats kernel launch overhead; we keep
    # the kernel path here so the kernel is always exercised.)
    xt = inputs.reshape(n, 3).transpose(1, 0)

    # Tile the N (lane) axis; pad to the block size.
    if n <= block_n:
        bn = _round_up(max(n, 1), 128)
        n_pad = bn
    else:
        bn = block_n
        n_pad = _round_up(n, bn)
    grid_n = n_pad // bn
    if n_pad != n:
        xt = jnp.pad(xt, ((0, 0), (0, n_pad - n)))

    # [w0, w1, w2, b] as scalars resident in SMEM.
    wb = jnp.concatenate([
        jnp.asarray(weight, dtype=jnp.float32).reshape(-1),
        jnp.asarray(bias, dtype=jnp.float32).reshape(-1),
    ])

    in_specs = [
        pl.BlockSpec(memory_space=pltpu.MemorySpace.SMEM),   # [w0,w1,w2,b]
        pl.BlockSpec((3, bn), lambda i: (0, i)),             # x tile
    ]
    args = [wb, xt]

    if training:
        if key is None:
            key = jax.random.PRNGKey(0)
        # TODO(synk): on real hardware this could use the in-kernel TPU PRNG
        # (pltpu.prng_seed + prng_random_bits, seeded with seed+program_id);
        # the generic CPU interpreter cannot lower those primitives.
        bits = jax.random.bits(key, (3, n_pad), dtype=jnp.uint32)
        in_specs.append(pl.BlockSpec((3, bn), lambda i: (0, i)))
        args.append(bits)

    out = pl.pallas_call(
        functools.partial(_mynet_kernel, training=training),
        out_shape=jax.ShapeDtypeStruct((1, n_pad), jnp.float32),
        grid=(grid_n,),
        in_specs=in_specs,
        out_specs=pl.BlockSpec((1, bn), lambda i: (0, i)),
        compiler_params=pltpu.CompilerParams(
            dimension_semantics=("parallel",)),
    )(*args)

    return out[0, :n].reshape(lead + (1,))


if __name__ == "__main__":
    key = jax.random.PRNGKey(0)
    k_x, k_w, k_b, k_drop = jax.random.split(key, 4)

    # Small shapes consistent with the module: (batch=2, seq=8, features=3).
    x = jax.random.normal(k_x, (2, 8, 3), dtype=jnp.float32)

    # nn.Linear(3, 1) parameters: weight (1, 3), bias (1,).
    w = jax.random.normal(k_w, (1, 3), dtype=jnp.float32) * 0.5
    b = jax.random.normal(k_b, (1,), dtype=jnp.float32) * 0.1

    # Eval mode (dropout = identity): check against a plain-JAX reference.
    logit_eval = mynet_forward(x, w, b, training=False)
    jax.block_until_ready(logit_eval)
    ref = x.astype(jnp.float32) @ w.reshape(3, 1) + b
    assert logit_eval.shape == (2, 8, 1)
    assert jnp.allclose(logit_eval, ref, atol=1e-5, rtol=1e-5)

    # Training mode (inverted dropout, keep prob 0.7) — exercise that path.
    logit_train = mynet_forward(x, w, b, key=k_drop, training=True)
    jax.block_until_ready(logit_train)
    assert logit_train.shape == (2, 8, 1)
    assert bool(jnp.all(jnp.isfinite(logit_train)))

    print("KERNEL_OK")
</pallas_src>

<mosaic_0001>
module attributes {stable_mosaic.version = 11 : i64} {
  func.func @_mynet_kernel(%arg0: i32, %arg1: memref<4xf32, #tpu.memory_space<smem>>, %arg2: memref<3x128xf32, #tpu.memory_space<vmem>>, %arg3: memref<1x128xf32, #tpu.memory_space<vmem>>) attributes {dimension_semantics = [#tpu.dimension_semantics<parallel>], iteration_bounds = array<i64: 1>, scalar_prefetch = 0 : i64, scratch_operands = 0 : i64, tpu.core_type = #tpu.core_type<tc>, window_params = [{transform_indices = @transform_0, window_bounds = array<i64: 4>}, {transform_indices = @transform_1, window_bounds = array<i64: 3, 128>}, {transform_indices = @transform_2, window_bounds = array<i64: 1, 128>}]} {
    %c0 = arith.constant 0 : index
    %c0_0 = arith.constant 0 : index
    %0 = vector.load %arg2[%c0, %c0_0] : memref<3x128xf32, #tpu.memory_space<vmem>>, vector<3x128xf32>
    %c0_1 = arith.constant 0 : index
    %1 = memref.load %arg1[%c0_1] : memref<4xf32, #tpu.memory_space<smem>>
    %c1 = arith.constant 1 : index
    %2 = memref.load %arg1[%c1] : memref<4xf32, #tpu.memory_space<smem>>
    %c2 = arith.constant 2 : index
    %3 = memref.load %arg1[%c2] : memref<4xf32, #tpu.memory_space<smem>>
    %c3 = arith.constant 3 : index
    %4 = memref.load %arg1[%c3] : memref<4xf32, #tpu.memory_space<smem>>
    %5 = vector.extract_strided_slice %0 {offsets = [0, 0], sizes = [1, 128], strides = [1, 1]} : vector<3x128xf32> to vector<1x128xf32>
    %6 = vector.broadcast %1 : f32 to vector<1x128xf32>
    %7 = arith.mulf %5, %6 : vector<1x128xf32>
    %8 = vector.extract_strided_slice %0 {offsets = [1, 0], sizes = [1, 128], strides = [1, 1]} : vector<3x128xf32> to vector<1x128xf32>
    %9 = vector.broadcast %2 : f32 to vector<1x128xf32>
    %10 = arith.mulf %8, %9 : vector<1x128xf32>
    %11 = arith.addf %7, %10 : vector<1x128xf32>
    %12 = vector.extract_strided_slice %0 {offsets = [2, 0], sizes = [1, 128], strides = [1, 1]} : vector<3x128xf32> to vector<1x128xf32>
    %13 = vector.broadcast %3 : f32 to vector<1x128xf32>
    %14 = arith.mulf %12, %13 : vector<1x128xf32>
    %15 = arith.addf %11, %14 : vector<1x128xf32>
    %16 = vector.broadcast %4 : f32 to vector<1x128xf32>
    %17 = arith.addf %15, %16 : vector<1x128xf32>
    %c0_2 = arith.constant 0 : index
    %c0_3 = arith.constant 0 : index
    %18 = vector.load %arg3[%c0_2, %c0_3] : memref<1x128xf32, #tpu.memory_space<vmem>>, vector<1x128xf32>
    tpu.vector_store %arg3[%c0_2, %c0_3], %17 {strides = array<i32>} : memref<1x128xf32, #tpu.memory_space<vmem>>, vector<1x128xf32>,
    return
  }
  func.func @transform_0(%arg0: i32) -> i32 {
    %c0_i32 = arith.constant 0 : i32
    %c0_i32_0 = arith.constant 0 : i32
    return %c0_i32 : i32
  }
  func.func @transform_1(%arg0: i32) -> (i32, i32) {
    %c0_i32 = arith.constant 0 : i32
    %c0_i32_0 = arith.constant 0 : i32
    return %c0_i32, %arg0 : i32, i32
  }
  func.func @transform_2(%arg0: i32) -> (i32, i32) {
    %c0_i32 = arith.constant 0 : i32
    %c0_i32_0 = arith.constant 0 : i32
    return %c0_i32, %arg0 : i32, i32
  }
}

</mosaic_0001>

<llo_original>
// kernel: tpu_custom_call.1
$region0: #{tpu_custom_call.1}
  #allocation0 [shape = 'u32[]', space=smem, size = 0x4, offset = 0x4, fixed_abs, tag = 'smem constant byte address 0x4 - core index']
  #allocation1 [shape = 'u32[144,128]{1,0:T(1,128)}', space=vmem, size = 0x12000, scoped, tag = 'internal scratch']
  %s0 = inlined_call_operand.hbm [shape: f32[4], index: 0, kind: input, shape index: {}]
  %s1 = inlined_call_operand.hbm [shape: f32[3,128], index: 1, kind: input, shape index: {}]
  %s2 = inlined_call_operand.hbm [shape: f32[1,128], index: 2, kind: output, shape index: {}]
  %s3 = sld [smem:[#allocation0]]
  $region26: #{tpu_custom_call.1} parent=0
    _
  %s5 = ssub.s32 1, %s3
  %s6 = scalar_select 0, %s5, %s3
  $region1: #{tpu_custom_call.1} parent=0
    #allocation2 [shape = 'u8[512]{0}', space=smem, size = 0x200, scoped, tag = 'input window, operand 0, single buffered']
    #allocation3 [shape = 's32[1]{0}', space=sflag, size = 0x4, scoped, tag = 'scoped memory for tpu_custom_call.1']
    #allocation4 [shape = 's32[1]{0}', space=sflag, size = 0x4, scoped, tag = 'scoped memory for tpu_custom_call.1']
    #allocation5 [shape = 's32[1]{0}', space=sflag, size = 0x4, scoped, tag = 'scoped memory for tpu_custom_call.1']
    #allocation6 [shape = 'u8[2048]{0}', space=vmem, size = 0x800, scoped, tag = 'input window, operand 1, single buffered']
    #allocation7 [shape = 'u8[512]{0}', space=vmem, size = 0x400, scoped, tag = 'output window, operand 0, single buffered']
    %7 = vsyncpa [#allocation5], 0
    %8 = vsyncpa [#allocation3], 0
    %9 = vsyncpa [#allocation4], 0
    // Predicated region
    $region2: #{tpu_custom_call.1} parent=1 // pred_check
      _
    $region3: #{tpu_custom_call.1} parent=1 // pred_check_branch
      %11 = sbr.rel (0) target = $region5
    $region4: #{tpu_custom_call.1} parent=1 // pred_region
      %s13 = ssub.s32 16, 16
      %14 = vsyncadd [#allocation5], %s13
      %17 = dma.hbm_to_smem %s0, 16, [#allocation2], [#allocation5]
    $region5: #{tpu_custom_call.1} parent=1 // pred_fallthru
      _
    // Predicated region
    $region6: #{tpu_custom_call.1} parent=1 // pred_check
      _
    $region7: #{tpu_custom_call.1} parent=1 // pred_check_branch
      %19 = sbr.rel (0) target = $region9
    $region8: #{tpu_custom_call.1} parent=1 // pred_region
      %s21 = ssub.s32 64, 64
      %22 = vsyncadd [#allocation3], %s21
      %s24 = sshll.u32 [#allocation6], 4
      %s25 = int_to_ptr.vmem [resolvable:$true] %s24
      %27 = dma.hbm_to_vmem [thread:$0]  %s1, 64, %s25, [#allocation3]
    $region9: #{tpu_custom_call.1} parent=1 // pred_fallthru
      _
    // Predicated region
    $region10: #{tpu_custom_call.1} parent=1 // pred_check
      _
    $region11: #{tpu_custom_call.1} parent=1 // pred_check_branch
      %29 = sbr.rel (0) target = $region13
    $region12: #{tpu_custom_call.1} parent=1 // pred_region
      %30 = dma.done [#allocation5], 16
    $region13: #{tpu_custom_call.1} parent=1 // pred_fallthru
      _
    // Predicated region
    $region14: #{tpu_custom_call.1} parent=1 // pred_check
      _
    $region15: #{tpu_custom_call.1} parent=1 // pred_check_branch
      %32 = sbr.rel (0) target = $region17
    $region16: #{tpu_custom_call.1} parent=1 // pred_region
      %33 = dma.done [#allocation3], 64
    $region17: #{tpu_custom_call.1} parent=1 // pred_fallthru
      _
    %34 = sfence
    %v35 = vld [vmem:[#allocation6] sm:$0x7]
    %s36 = sld [smem:[#allocation2]]
    %s37 = sld [smem:[#allocation2 + $0x1]]
    %s38 = sld [smem:[#allocation2 + $0x2]]
    %s39 = sld [smem:[#allocation2 + $0x3]]
    %v40 = vstv %s36
    %v41 = vmul.f32 %v35, %v40
    %v42 = vstv %s37
    %v43 = vmul.f32 %v35, %v42
    %v45 = vrot.slane %v43, 1
    %v47 = vadd.f32 %v41, %v45
    %v48 = vstv %s38
    %v49 = vmul.f32 %v35, %v48
    %v51 = vrot.slane %v49, 2
    %v53 = vadd.f32 %v47, %v51
    %v54 = vstv %s39
    %v55 = vadd.f32 %v53, %v54
    %56 = vst [vmem:[#allocation7] sm:$0x1] %v55
    // Predicated region
    $region18: #{tpu_custom_call.1} parent=1 // pred_check
      _
    $region19: #{tpu_custom_call.1} parent=1 // pred_check_branch
      %58 = sbr.rel (0) target = $region21
    $region20: #{tpu_custom_call.1} parent=1 // pred_region
      %s60 = ssub.s32 16, 16
      %61 = vsyncadd [#allocation4], %s60
      %s63 = sshll.u32 [#allocation7], 4
      %s64 = int_to_ptr.vmem [resolvable:$true] %s63
      %66 = dma.vmem_to_hbm [thread:$0]  %s64, 16, %s2, [#allocation4]
    $region21: #{tpu_custom_call.1} parent=1 // pred_fallthru
      _
    // Predicated region
    $region22: #{tpu_custom_call.1} parent=1 // pred_check
      _
    $region23: #{tpu_custom_call.1} parent=1 // pred_check_branch
      %68 = sbr.rel (0) target = $region25
    $region24: #{tpu_custom_call.1} parent=1 // pred_region
      %69 = dma.done [#allocation4], 16
    $region25: #{tpu_custom_call.1} parent=1 // pred_fallthru
      _
    %70 = vsyncpa [#allocation3], 1
    %71 = vsyncpa [#allocation4], 1
    %72 = vsyncpa [#allocation5], 1

</llo_original>
